<compile_context>
chip_gen: v7x
topology: tpu7x:2x2x1
jax: 0.10.0
libtpu: 0.0.40
codegen_flags: <defaults>
</compile_context>

<pallas_src>
import functools

import jax
import jax.numpy as jnp
from jax import lax
from jax.scipy.linalg import solve_triangular
from jax.experimental import pallas as pl
from jax.experimental.pallas import tpu as pltpu


# ----------------------------- fused Pallas kernel ---------------------------

def _fused_rel_pos_kernel(rq_ref, rel_ref, w_ref, gram_ref, *, t):
    """Fused per-block kernel.

    rq_ref:   (B_blk*T, D)   queries (heads squeezed, batch folded into rows)
    rel_ref:  (R_pad, D)     rel_pos_emb zero-padded to a multiple of 128 rows
    w_ref:    (B_blk*T, D)   w = x^T @ rq  (x = absolute-position logits), f32
    gram_ref: (B_blk, D, D)  gram = rq^T @ rq, f32
    """
    bb = rq_ref.shape[0] // t
    rq_all = rq_ref[...]                              # (B_blk*T, D)
    rel = rel_ref[...]                                # (R_pad, D)

    # 1) relative logits for the whole batch block in ONE MXU matmul
    #    (batch folded into M): emb[b*T + i, k] = sum_d rq[b,i,d] * rel[k,d]
    emb = lax.dot_general(rq_all, rel, (((1,), (1,)), ((), ())),
                          preferred_element_type=jnp.float32)   # (B_blk*T, R_pad)

    for bi in range(bb):                              # static unroll over block
        rows = slice(bi * t, (bi + 1) * t)            # sublane-aligned slice
        rq_b = rq_all[rows, :]                        # (T, D)
        emb_b = emb[rows, :]                          # (T, R_pad) f32

        # 2) relative -> absolute via one strided XLU roll (np.roll semantics,
        #    row i rotated by +i):  rolled[i, j] = emb_b[i, (j - i) mod R_pad].
        #    The wanted x[i, jj] = emb_b[i, (T-1) + jj - i] is rolled[i, (T-1)+jj]
        #    for jj in [0, T): the source index stays in [0, 2T-2], so it never
        #    wraps and never touches the zero-padded columns.
        rolled = pltpu.roll(emb_b, shift=0, axis=1, stride=1, stride_axis=0)
        x = rolled[:, t - 1:2 * t - 1]                # (T, T) absolute logits

        # 3) w = x^T @ rq via contracting dim 0 (no transpose materialized).
        w_ref[rows, :] = lax.dot_general(
            x.astype(rq_b.dtype), rq_b, (((0,), (0,)), ((), ())),
            preferred_element_type=jnp.float32)

        # 4) gram = rq^T @ rq, f32 accumulation (feeds the Cholesky solve).
        gram_ref[bi] = lax.dot_general(
            rq_b, rq_b, (((0,), (0,)), ((), ())),
            preferred_element_type=jnp.float32)


# ----------------------------- wrapper ---------------------------------------

def rel_pos_emb_1d_forward(q, rel_emb, *, batch_block=None,
                           compute_dtype=jnp.bfloat16):
    """Full RelPosEmb1DAISummer.forward (shared heads, H == 1)."""
    b, h, t, d = q.shape
    assert h == 1, "reference forward only type-checks for heads == 1"
    r = rel_emb.shape[0]
    assert r == 2 * t - 1
    assert t % 8 == 0, "token count must be sublane aligned"

    if batch_block is None:
        # Keep >= 2 grid steps so both v7x TensorCores get work; block the rest
        # to amortize the ~0.35us/step overhead (v5e/v6e: single TC, no cost).
        batch_block = b // 2 if (b % 2 == 0 and b >= 2) else 1
    assert b % batch_block == 0
    num_blocks = b // batch_block

    # Zero-pad R up to a lane multiple: padded logits columns are never read by
    # the relative->absolute shuffle, and the matmul/roll stay lane-dense.
    r_pad = 128 * pl.cdiv(r, 128)
    rel_p = jnp.pad(rel_emb.astype(compute_dtype), ((0, r_pad - r), (0, 0)))
    rq_flat = q[:, 0].reshape(b * t, d).astype(compute_dtype)     # (B*T, D)

    flops = b * (2 * t * d * r_pad + 2 * t * t * d + 2 * t * d * d)
    bytes_accessed = (rq_flat.size * rq_flat.dtype.itemsize
                      + rel_p.size * rel_p.dtype.itemsize
                      + (b * t * d + b * d * d) * 4)

    kernel = functools.partial(_fused_rel_pos_kernel, t=t)
    w_flat, gram = pl.pallas_call(
        kernel,
        out_shape=(jax.ShapeDtypeStruct((b * t, d), jnp.float32),
                   jax.ShapeDtypeStruct((b, d, d), jnp.float32)),
        grid=(num_blocks,),
        in_specs=[pl.BlockSpec((batch_block * t, d), lambda i: (i, 0)),
                  pl.BlockSpec((r_pad, d), lambda i: (0, 0))],
        out_specs=(pl.BlockSpec((batch_block * t, d), lambda i: (i, 0)),
                   pl.BlockSpec((batch_block, d, d), lambda i: (i, 0, 0))),
        compiler_params=pltpu.CompilerParams(
            dimension_semantics=("parallel",)),
        cost_estimate=pl.CostEstimate(flops=flops, transcendentals=0,
                                      bytes_accessed=bytes_accessed),
    )(rq_flat, rel_p)
    w = w_flat.reshape(b, t, d)

    # out = w @ gram^{-1} (== (gram^{-1} @ rq^T @ x)^T, gram symmetric), via a
    # Cholesky solve on the tiny SPD Gram matrix (requires T >= D and full
    # column rank rq, same implicit assumption as the reference's inv).
    # TODO(synk): dense Cholesky / triangular solve has no clean Pallas
    # equivalent; done in plain JAX on the (D, D) system per batch.
    def _solve(g_b, w_b):
        chol = jnp.linalg.cholesky(g_b)                    # g = L L^T
        y = solve_triangular(chol, w_b.T, lower=True)      # L y = w^T
        out_t = solve_triangular(chol.T, y, lower=False)   # L^T X = y
        return out_t.T                                     # (T, D)

    return jax.vmap(_solve)(gram, w)                       # (B, T, D)


# ----------------------------- reference (pure jnp) ---------------------------

def relative_to_absolute_rearrange(emb):
    """The pad / flatten / reshape / slice trick from relative_to_absolute.

    emb: (B, H, L, 2L-1) -> (B, L, L)  (H is squeezed; reference requires H==1)
    """
    b, h, l, _ = emb.shape
    x = jnp.concatenate([emb, jnp.zeros((b, h, l, 1), emb.dtype)], axis=3)
    flat = x.reshape(b, h, l * 2 * l)
    flat = jnp.concatenate([flat, jnp.zeros((b, h, l - 1), emb.dtype)], axis=2)
    final = flat.reshape(b, h, l + 1, 2 * l - 1)
    out = final[:, :, :l, l - 1:]                  # (B, H, L, L)
    out = jnp.transpose(out, (0, 2, 3, 1))         # (B, L, L, H)
    return out[..., 0]                             # squeeze(-1), H == 1


def _reference(q, rel_emb):
    emb = jnp.einsum('bhtd,rd->bhtr', q, rel_emb)
    x = relative_to_absolute_rearrange(emb)
    rq = q[:, 0]
    rqt = jnp.swapaxes(rq, 1, 2)
    g_inv = jnp.linalg.inv(jnp.matmul(rqt, rq))
    r = jnp.matmul(jnp.matmul(g_inv, rqt), x)
    return jnp.swapaxes(r, 1, 2)


# ----------------------------- main -------------------------------------------

if __name__ == "__main__":
    # Shapes match the module's actual use inside ObjectSeparatedAttention:
    # RelPosEmb1DAISummer(tokens=64, dim_head=3) applied to (B, 1, 64, 3).
    tokens, dim_head, batch, heads = 64, 3, 4, 1

    key = jax.random.PRNGKey(0)
    k_emb, k_q = jax.random.split(key)

    scale = dim_head ** (-0.5)
    # nn.Parameter(torch.randn(2*tokens - 1, dim_head) * scale), deterministic here
    rel_pos_emb = (jax.random.normal(k_emb, (2 * tokens - 1, dim_head),
                                     jnp.float32) * scale)
    q = jax.random.normal(k_q, (batch, heads, tokens, dim_head), jnp.float32)

    out = jax.block_until_ready(rel_pos_emb_1d_forward(q, rel_pos_emb))

    assert out.shape == (batch, tokens, dim_head), out.shape
    assert bool(jnp.all(jnp.isfinite(out)))

    ref = jax.block_until_ready(_reference(q, rel_pos_emb))
    assert bool(jnp.allclose(out, ref, rtol=5e-2, atol=5e-2)), (
        float(jnp.max(jnp.abs(out - ref))))

    print("KERNEL_OK")
</pallas_src>

<mosaic_0001>
module attributes {stable_mosaic.version = 11 : i64} {
  func.func @_fused_rel_pos_kernel(%arg0: i32, %arg1: memref<128x3xbf16, #tpu.memory_space<vmem>>, %arg2: memref<128x3xbf16, #tpu.memory_space<vmem>>, %arg3: memref<128x3xf32, #tpu.memory_space<vmem>>, %arg4: memref<2x3x3xf32, #tpu.memory_space<vmem>>) attributes {dimension_semantics = [#tpu.dimension_semantics<parallel>], iteration_bounds = array<i64: 2>, scalar_prefetch = 0 : i64, scratch_operands = 0 : i64, tpu.core_type = #tpu.core_type<tc>, window_params = [{transform_indices = @transform_0, window_bounds = array<i64: 128, 3>}, {pipeline_mode = #tpu.pipeline_mode<synchronous>, transform_indices = @transform_1, window_bounds = array<i64: 128, 3>}, {transform_indices = @transform_2, window_bounds = array<i64: 128, 3>}, {transform_indices = @transform_3, window_bounds = array<i64: 2, 3, 3>}]} {
    %c0 = arith.constant 0 : index
    %c0_0 = arith.constant 0 : index
    %0 = vector.load %arg1[%c0, %c0_0] : memref<128x3xbf16, #tpu.memory_space<vmem>>, vector<128x3xbf16>
    %c0_1 = arith.constant 0 : index
    %c0_2 = arith.constant 0 : index
    %1 = vector.load %arg2[%c0_1, %c0_2] : memref<128x3xbf16, #tpu.memory_space<vmem>>, vector<128x3xbf16>
    %cst = arith.constant dense<0.000000e+00> : vector<128x128xf32>
    %2 = tpu.matmul %0, %1, %cst {dimension_numbers = #tpu.dot_dimension_numbers<[1], [1], [0], [0], [0, 0, 1, 0], [], []>} : vector<128x3xbf16>, vector<128x3xbf16>, vector<128x128xf32> -> vector<128x128xf32>
    %3 = vector.extract_strided_slice %0 {offsets = [0, 0], sizes = [64, 3], strides = [1, 1]} : vector<128x3xbf16> to vector<64x3xbf16>
    %4 = vector.extract_strided_slice %2 {offsets = [0, 0], sizes = [64, 128], strides = [1, 1]} : vector<128x128xf32> to vector<64x128xf32>
    %c0_i32 = arith.constant 0 : i32
    %5 = tpu.dynamic_rotate %4 by %c0_i32 dim 1 {stride = 1 : si32, stride_dimension = 0 : si32} : vector<64x128xf32>, i32 -> vector<64x128xf32>
    %6 = vector.extract_strided_slice %5 {offsets = [0, 63], sizes = [64, 64], strides = [1, 1]} : vector<64x128xf32> to vector<64x64xf32>
    %7 = arith.truncf %6 : vector<64x64xf32> to vector<64x64xbf16>
    %cst_3 = arith.constant dense<0.000000e+00> : vector<64x3xf32>
    %8 = tpu.matmul %7, %3, %cst_3 {dimension_numbers = #tpu.dot_dimension_numbers<[0], [0], [1], [1], [0, 1, 1, 1], [], []>} : vector<64x64xbf16>, vector<64x3xbf16>, vector<64x3xf32> -> vector<64x3xf32>
    %c0_4 = arith.constant 0 : index
    %c0_5 = arith.constant 0 : index
    %9 = vector.load %arg3[%c0_4, %c0_5] : memref<128x3xf32, #tpu.memory_space<vmem>>, vector<64x3xf32>
    tpu.vector_store %arg3[%c0_4, %c0_5], %8 {strides = array<i32>} : memref<128x3xf32, #tpu.memory_space<vmem>>, vector<64x3xf32>,
    %cst_6 = arith.constant dense<0.000000e+00> : vector<3x3xf32>
    %10 = tpu.matmul %3, %3, %cst_6 {dimension_numbers = #tpu.dot_dimension_numbers<[0], [0], [1], [1], [0, 1, 1, 1], [], []>} : vector<64x3xbf16>, vector<64x3xbf16>, vector<3x3xf32> -> vector<3x3xf32>
    %c0_7 = arith.constant 0 : index
    %c0_8 = arith.constant 0 : index
    %c0_9 = arith.constant 0 : index
    %11 = vector.load %arg4[%c0_7, %c0_8, %c0_9] : memref<2x3x3xf32, #tpu.memory_space<vmem>>, vector<1x3x3xf32>
    %12 = vector.shape_cast %11 : vector<1x3x3xf32> to vector<3x3xf32>
    %13 = vector.shape_cast %10 : vector<3x3xf32> to vector<1x3x3xf32>
    tpu.vector_store %arg4[%c0_7, %c0_8, %c0_9], %13 {strides = array<i32>} : memref<2x3x3xf32, #tpu.memory_space<vmem>>, vector<1x3x3xf32>,
    %14 = vector.extract_strided_slice %0 {offsets = [64, 0], sizes = [64, 3], strides = [1, 1]} : vector<128x3xbf16> to vector<64x3xbf16>
    %15 = vector.extract_strided_slice %2 {offsets = [64, 0], sizes = [64, 128], strides = [1, 1]} : vector<128x128xf32> to vector<64x128xf32>
    %c0_i32_10 = arith.constant 0 : i32
    %16 = tpu.dynamic_rotate %15 by %c0_i32_10 dim 1 {stride = 1 : si32, stride_dimension = 0 : si32} : vector<64x128xf32>, i32 -> vector<64x128xf32>
    %17 = vector.extract_strided_slice %16 {offsets = [0, 63], sizes = [64, 64], strides = [1, 1]} : vector<64x128xf32> to vector<64x64xf32>
    %18 = arith.truncf %17 : vector<64x64xf32> to vector<64x64xbf16>
    %cst_11 = arith.constant dense<0.000000e+00> : vector<64x3xf32>
    %19 = tpu.matmul %18, %14, %cst_11 {dimension_numbers = #tpu.dot_dimension_numbers<[0], [0], [1], [1], [0, 1, 1, 1], [], []>} : vector<64x64xbf16>, vector<64x3xbf16>, vector<64x3xf32> -> vector<64x3xf32>
    %c64 = arith.constant 64 : index
    %c0_12 = arith.constant 0 : index
    %20 = vector.load %arg3[%c64, %c0_12] : memref<128x3xf32, #tpu.memory_space<vmem>>, vector<64x3xf32>
    tpu.vector_store %arg3[%c64, %c0_12], %19 {strides = array<i32>} : memref<128x3xf32, #tpu.memory_space<vmem>>, vector<64x3xf32>,
    %cst_13 = arith.constant dense<0.000000e+00> : vector<3x3xf32>
    %21 = tpu.matmul %14, %14, %cst_13 {dimension_numbers = #tpu.dot_dimension_numbers<[0], [0], [1], [1], [0, 1, 1, 1], [], []>} : vector<64x3xbf16>, vector<64x3xbf16>, vector<3x3xf32> -> vector<3x3xf32>
    %c1 = arith.constant 1 : index
    %c0_14 = arith.constant 0 : index
    %c0_15 = arith.constant 0 : index
    %22 = vector.load %arg4[%c1, %c0_14, %c0_15] : memref<2x3x3xf32, #tpu.memory_space<vmem>>, vector<1x3x3xf32>
    %23 = vector.shape_cast %22 : vector<1x3x3xf32> to vector<3x3xf32>
    %24 = vector.shape_cast %21 : vector<3x3xf32> to vector<1x3x3xf32>
    tpu.vector_store %arg4[%c1, %c0_14, %c0_15], %24 {strides = array<i32>} : memref<2x3x3xf32, #tpu.memory_space<vmem>>, vector<1x3x3xf32>,
    return
  }
  func.func @transform_0(%arg0: i32) -> (i32, i32) {
    %c0_i32 = arith.constant 0 : i32
    %c0_i32_0 = arith.constant 0 : i32
    return %arg0, %c0_i32 : i32, i32
  }
  func.func @transform_1(%arg0: i32) -> (i32, i32) {
    %c0_i32 = arith.constant 0 : i32
    %c0_i32_0 = arith.constant 0 : i32
    %c0_i32_1 = arith.constant 0 : i32
    return %c0_i32, %c0_i32_0 : i32, i32
  }
  func.func @transform_2(%arg0: i32) -> (i32, i32) {
    %c0_i32 = arith.constant 0 : i32
    %c0_i32_0 = arith.constant 0 : i32
    return %arg0, %c0_i32 : i32, i32
  }
  func.func @transform_3(%arg0: i32) -> (i32, i32, i32) {
    %c0_i32 = arith.constant 0 : i32
    %c0_i32_0 = arith.constant 0 : i32
    %c0_i32_1 = arith.constant 0 : i32
    return %arg0, %c0_i32, %c0_i32_0 : i32, i32, i32
  }
}

</mosaic_0001>

<llo_original>
// kernel: tpu_custom_call.1
$region0: #{tpu_custom_call.1}
  #allocation0 [shape = 'u32[]', space=smem, size = 0x4, offset = 0x4, fixed_abs, tag = 'smem constant byte address 0x4 - core index']
  #allocation1 [shape = 'u32[144,128]{1,0:T(1,128)}', space=vmem, size = 0x12000, scoped, tag = 'internal scratch']
  %s0 = inlined_call_operand.vmem [shape: bf16[256,3], index: 0, kind: input, shape index: {}]
  %s1 = inlined_call_operand.vmem [shape: bf16[128,3], index: 1, kind: input, shape index: {}]
  %s2 = inlined_call_operand.vmem [shape: f32[256,3], index: 2, kind: output, shape index: {0}]
  %s3 = inlined_call_operand.vmem [shape: f32[4,3,3], index: 3, kind: output, shape index: {1}]
  %4 = xla_tuple %s2, %s3
  %s5 = sld [smem:[#allocation0]]
  $region49: #{tpu_custom_call.1} parent=0
    _
  %s7 = ssub.s32 1, %s5
  %s8 = scalar_select 0, %s7, %s5
  loop: start=0, step=1, limit=4
  $region2: #{tpu_custom_call.1} parent=0 // loop_pre_header
    _
  $region3: #{tpu_custom_call.1} parent=0 // loop_header
    %s10 = sphi 0, %s14
    %p11 = scmp.ge.s32.totalorder %s10, 4
    %s20 = sphi 0, %s22
    %s23 = sphi 0, %s20
    %s24 = sphi 0, %s23
    %s40 = sphi 0, %s24
    %s44 = sphi 0, %s44
    %s46 = sphi 0, %s44
    %s47 = sphi 0, %s46
    %s61 = sphi 0, %s47
    %s67 = sphi 0, %s69
    %s70 = sphi 0, %s67
    %s71 = sphi 0, %s70
    %s87 = sphi 0, %s71
    %s93 = sphi 0, %s95
    %s96 = sphi 0, %s93
    %s97 = sphi 0, %s96
    %s113 = sphi 0, %s97
  $region4: #{tpu_custom_call.1} parent=0 // loop_header_branch
    %13 = sbr.rel (%p11) target = $region8
  $region5: #{tpu_custom_call.1} parent=0 // loop_body
    %s15 = ssub.s32 %s10, 1
    %s16 = ssub.s32 %s10, 2
    %s17 = sadd.s32 %s10, 1
    %s18 = ssub.s32 %s10, %s17
    %p19 = scmp.eq.s32.totalorder %s18, 0
    %s21 = sadd.s32 %s20, 1
    %s22 = scalar_select %p19, %s20, %s21
    %p25 = pneg %p19
    %p26 = scmp.eq.s32.totalorder %s10, 1
    %p27 = por %p25, %p26
    %p28 = scmp.ne.s32.totalorder %s20, %s23
    %p29 = scmp.eq.s32.totalorder %s10, 0
    %p30 = por %p28, %p29
    %p31 = scmp.ne.s32.totalorder %s20, %s23
    %p32 = scmp.eq.s32.totalorder %s15, 1
    %p33 = por %p31, %p32
    %p34 = scmp.ne.s32.totalorder %s23, %s24
    %p35 = scmp.eq.s32.totalorder %s15, 0
    %p36 = por %p34, %p35
    %p37 = scmp.ne.s32.totalorder %s23, %s24
    %p38 = scmp.eq.s32.totalorder %s16, 1
    %p39 = por %p37, %p38
    %p41 = scmp.ne.s32.totalorder %s24, %s40
    %p42 = scmp.eq.s32.totalorder %s16, 0
    %p43 = por %p41, %p42
    %s45 = sadd.s32 %s44, 1
    %p48 = scmp.eq.s32.totalorder %s10, 1
    %p49 = scmp.ne.s32.totalorder %s44, %s46
    %p50 = scmp.eq.s32.totalorder %s10, 0
    %p51 = por %p49, %p50
    %p52 = scmp.ne.s32.totalorder %s44, %s46
    %p53 = scmp.eq.s32.totalorder %s15, 1
    %p54 = por %p52, %p53
    %p55 = scmp.ne.s32.totalorder %s46, %s47
    %p56 = scmp.eq.s32.totalorder %s15, 0
    %p57 = por %p55, %p56
    %p58 = scmp.ne.s32.totalorder %s46, %s47
    %p59 = scmp.eq.s32.totalorder %s16, 1
    %p60 = por %p58, %p59
    %p62 = scmp.ne.s32.totalorder %s47, %s61
    %p63 = scmp.eq.s32.totalorder %s16, 0
    %p64 = por %p62, %p63
    %s65 = ssub.s32 %s10, %s17
    %p66 = scmp.eq.s32.totalorder %s65, 0
    %s68 = sadd.s32 %s67, 1
    %s69 = scalar_select %p66, %s67, %s68
    %p72 = pneg %p66
    %p73 = scmp.eq.s32.totalorder %s10, 1
    %p74 = por %p72, %p73
    %p75 = scmp.ne.s32.totalorder %s67, %s70
    %p76 = scmp.eq.s32.totalorder %s10, 0
    %p77 = por %p75, %p76
    %p78 = scmp.ne.s32.totalorder %s67, %s70
    %p79 = scmp.eq.s32.totalorder %s15, 1
    %p80 = por %p78, %p79
    %p81 = scmp.ne.s32.totalorder %s70, %s71
    %p82 = scmp.eq.s32.totalorder %s15, 0
    %p83 = por %p81, %p82
    %p84 = scmp.ne.s32.totalorder %s70, %s71
    %p85 = scmp.eq.s32.totalorder %s16, 1
    %p86 = por %p84, %p85
    %p88 = scmp.ne.s32.totalorder %s71, %s87
    %p89 = scmp.eq.s32.totalorder %s16, 0
    %p90 = por %p88, %p89
    %s91 = ssub.s32 %s10, %s17
    %p92 = scmp.eq.s32.totalorder %s91, 0
    %s94 = sadd.s32 %s93, 1
    %s95 = scalar_select %p92, %s93, %s94
    %p98 = pneg %p92
    %p99 = scmp.eq.s32.totalorder %s10, 1
    %p100 = por %p98, %p99
    %p101 = scmp.ne.s32.totalorder %s93, %s96
    %p102 = scmp.eq.s32.totalorder %s10, 0
    %p103 = por %p101, %p102
    %p104 = scmp.ne.s32.totalorder %s93, %s96
    %p105 = scmp.eq.s32.totalorder %s15, 1
    %p106 = por %p104, %p105
    %p107 = scmp.ne.s32.totalorder %s96, %s97
    %p108 = scmp.eq.s32.totalorder %s15, 0
    %p109 = por %p107, %p108
    %p110 = scmp.ne.s32.totalorder %s96, %s97
    %p111 = scmp.eq.s32.totalorder %s16, 1
    %p112 = por %p110, %p111
    %p114 = scmp.ne.s32.totalorder %s97, %s113
    %p115 = scmp.eq.s32.totalorder %s16, 0
    %p116 = por %p114, %p115
    %p117 = scmp.le.s32.totalorder 1, %s10
    %p118 = scmp.lt.s32.totalorder %s10, 3
    %p119 = pnand %p117, %p118
    %p120 = pneg %p119
    // Predicated region
    $region9: #{tpu_custom_call.1} parent=5 // pred_check
      _
    $region10: #{tpu_custom_call.1} parent=5 // pred_check_branch
      %122 = sbr.rel (%p119) target = $region12
    $region11: #{tpu_custom_call.1} parent=5 // pred_region
      %s123 = ssub.s32 %s10, 1
      // Predicated region
      $region13: #{tpu_custom_call.1} parent=11 // pred_check
        %p124 = pneg %p57
      $region14: #{tpu_custom_call.1} parent=11 // pred_check_branch
        %126 = sbr.rel (%p124) target = $region16
      $region15: #{tpu_custom_call.1} parent=11 // pred_region
        _
      $region16: #{tpu_custom_call.1} parent=11 // pred_fallthru
        _
    $region12: #{tpu_custom_call.1} parent=5 // pred_fallthru
      _
    %p127 = scmp.lt.s32.totalorder %s10, 2
    // Predicated region
    $region17: #{tpu_custom_call.1} parent=5 // pred_check
      %p128 = pneg %p127
    $region18: #{tpu_custom_call.1} parent=5 // pred_check_branch
      %130 = sbr.rel (%p128) target = $region20
    $region19: #{tpu_custom_call.1} parent=5 // pred_region
      // Predicated region
      $region21: #{tpu_custom_call.1} parent=19 // pred_check
        %p131 = pneg %p30
      $region22: #{tpu_custom_call.1} parent=19 // pred_check_branch
        %133 = sbr.rel (%p131) target = $region24
      $region23: #{tpu_custom_call.1} parent=19 // pred_region
        %s134 = smul.u32 16, %s10
        %p135 = scmp.lt.s32.totalorder %s134, 31
        %s136 = scalar_select %p135, %s134, 31
        %s137 = smul.addr %s136, 4
        %s138 = scalar_lea.vmem %s0, %s137
        %s139 = smul.u32 16, %s10
      $region24: #{tpu_custom_call.1} parent=19 // pred_fallthru
        _
    $region20: #{tpu_custom_call.1} parent=5 // pred_fallthru
      _
    %p140 = scmp.le.s32.totalorder 1, %s10
    %p141 = scmp.lt.s32.totalorder %s10, 3
    %p142 = pnand %p140, %p141
    %p143 = pneg %p142
    // Predicated region
    $region25: #{tpu_custom_call.1} parent=5 // pred_check
      _
    $region26: #{tpu_custom_call.1} parent=5 // pred_check_branch
      %145 = sbr.rel (%p142) target = $region28
    $region27: #{tpu_custom_call.1} parent=5 // pred_region
      %s146 = ssub.s32 %s10, 1
      %s147 = smul.u32 16, %s15
      %p148 = scmp.lt.s32.totalorder %s147, 31
      %s149 = scalar_select %p148, %s147, 31
      %s150 = smul.addr %s149, 4
      %s151 = scalar_lea.vmem %s0, %s150
      %p152 = pneg %p36
      %p153 = pneg %p33
      %p154 = pneg %p57
      %p155 = pneg %p54
      %p156 = pneg %p83
      %p157 = pneg %p80
      %s158 = smul.u32 16, %s15
      %p159 = scmp.lt.s32.totalorder %s158, 31
      %s160 = scalar_select %p159, %s158, 31
      %s161 = smul.addr %s160, 8
      %s162 = scalar_lea.vmem %s2, %s161
      %p163 = pneg %p109
      %p164 = pneg %p106
      %s165 = smul.u32 2, %s15
      %p166 = scmp.lt.s32.totalorder %s165, 3
      %s167 = scalar_select %p166, %s165, 3
      %s168 = smul.addr %s167, 4
      %s169 = scalar_lea.vmem %s3, %s168
      %s170 = smul.u32 16, %s15
      %p171 = scmp.lt.s32.totalorder %s170, 31
      %s172 = scalar_select %p171, %s170, 31
      %s173 = smul.addr %s172, 4
      %s174 = scalar_lea.vmem %s0, %s173
      %s175 = smul.u32 16, %s15
      %s176 = smul.u32 16, %s15
      %p177 = scmp.lt.s32.totalorder %s176, 31
      %s178 = scalar_select %p177, %s176, 31
      %s179 = smul.addr %s178, 8
      %s180 = scalar_lea.vmem %s2, %s179
      %s181 = smul.u32 16, %s15
      %s182 = smul.u32 2, %s15
      %p183 = scmp.lt.s32.totalorder %s182, 3
      %s184 = scalar_select %p183, %s182, 3
      %s185 = smul.addr %s184, 4
      %s186 = scalar_lea.vmem %s3, %s185
      %s187 = smul.u32 2, %s15
      %v189 = vld [vmem:[%s174] sm:$0xf]
      %v190 = vld [vmem:[%s174 + $0x4] sm:$0xf]
      %v191 = vld [vmem:[%s174 + $0x8] sm:$0xf]
      %v192 = vld [vmem:[%s174 + $0xc] sm:$0xf]
      %v193 = vld [vmem:[%s174 + $0x10] sm:$0xf]
      %v194 = vld [vmem:[%s174 + $0x14] sm:$0xf]
      %v195 = vld [vmem:[%s174 + $0x18] sm:$0xf]
      %v196 = vld [vmem:[%s174 + $0x1c] sm:$0xf]
      %v197 = vld [vmem:[%s174 + $0x20] sm:$0xf]
      %v198 = vld [vmem:[%s174 + $0x24] sm:$0xf]
      %v199 = vld [vmem:[%s174 + $0x28] sm:$0xf]
      %v200 = vld [vmem:[%s174 + $0x2c] sm:$0xf]
      %v201 = vld [vmem:[%s174 + $0x30] sm:$0xf]
      %v202 = vld [vmem:[%s174 + $0x34] sm:$0xf]
      %v203 = vld [vmem:[%s174 + $0x38] sm:$0xf]
      %v204 = vld [vmem:[%s174 + $0x3c] sm:$0xf]
      %v205 = vld [vmem:[%s1] sm:$0xf]
      %v206 = vld [vmem:[%s1 + $0x4] sm:$0xf]
      %v207 = vld [vmem:[%s1 + $0x8] sm:$0xf]
      %v208 = vld [vmem:[%s1 + $0xc] sm:$0xf]
      %v209 = vld [vmem:[%s1 + $0x10] sm:$0xf]
      %v210 = vld [vmem:[%s1 + $0x14] sm:$0xf]
      %v211 = vld [vmem:[%s1 + $0x18] sm:$0xf]
      %v212 = vld [vmem:[%s1 + $0x1c] sm:$0xf]
      %v213 = vld [vmem:[%s1 + $0x20] sm:$0xf]
      %v214 = vld [vmem:[%s1 + $0x24] sm:$0xf]
      %v215 = vld [vmem:[%s1 + $0x28] sm:$0xf]
      %v216 = vld [vmem:[%s1 + $0x2c] sm:$0xf]
      %v217 = vld [vmem:[%s1 + $0x30] sm:$0xf]
      %v218 = vld [vmem:[%s1 + $0x34] sm:$0xf]
      %v219 = vld [vmem:[%s1 + $0x38] sm:$0xf]
      %v220 = vld [vmem:[%s1 + $0x3c] sm:$0xf]
      %v237 = vunpack.c.l.b16 %v189
      %v238 = vunpack.c.l.b16 %v190
      %v239 = vunpack.c.l.b16 %v191
      %v240 = vunpack.c.l.b16 %v192
      %v241 = vunpack.c.l.b16 %v193
      %v242 = vunpack.c.l.b16 %v194
      %v243 = vunpack.c.l.b16 %v195
      %v244 = vunpack.c.l.b16 %v196
      %v245 = vunpack.c.l.b16 %v197
      %v246 = vunpack.c.l.b16 %v198
      %v247 = vunpack.c.l.b16 %v199
      %v248 = vunpack.c.l.b16 %v200
      %v249 = vunpack.c.l.b16 %v201
      %v250 = vunpack.c.l.b16 %v202
      %v251 = vunpack.c.l.b16 %v203
      %v252 = vunpack.c.l.b16 %v204
      %v253 = vpack.c.b16 %v238, %v237
      %v254 = vpack.c.b16 %v240, %v239
      %v255 = vpack.c.b16 %v242, %v241
      %v256 = vpack.c.b16 %v244, %v243
      %v257 = vpack.c.b16 %v246, %v245
      %v258 = vpack.c.b16 %v248, %v247
      %v259 = vpack.c.b16 %v250, %v249
      %v260 = vpack.c.b16 %v252, %v251
      %v277 = vunpack.c.l.b16 %v205
      %v278 = vunpack.c.l.b16 %v206
      %v279 = vunpack.c.l.b16 %v207
      %v280 = vunpack.c.l.b16 %v208
      %v281 = vunpack.c.l.b16 %v209
      %v282 = vunpack.c.l.b16 %v210
      %v283 = vunpack.c.l.b16 %v211
      %v284 = vunpack.c.l.b16 %v212
      %v285 = vunpack.c.l.b16 %v213
      %v286 = vunpack.c.l.b16 %v214
      %v287 = vunpack.c.l.b16 %v215
      %v288 = vunpack.c.l.b16 %v216
      %v289 = vunpack.c.l.b16 %v217
      %v290 = vunpack.c.l.b16 %v218
      %v291 = vunpack.c.l.b16 %v219
      %v292 = vunpack.c.l.b16 %v220
      %v293 = vpack.c.b16 %v278, %v277
      %v294 = vpack.c.b16 %v280, %v279
      %v295 = vpack.c.b16 %v282, %v281
      %v296 = vpack.c.b16 %v284, %v283
      %v297 = vpack.c.b16 %v286, %v285
      %v298 = vpack.c.b16 %v288, %v287
      %v299 = vpack.c.b16 %v290, %v289
      %v300 = vpack.c.b16 %v292, %v291
      %vm301 = vcmask 23552
      %v303 = vsel %vm301, %v253, 0
      %v306 = vsel %vm301, %v254, 0
      %v309 = vsel %vm301, %v255, 0
      %v312 = vsel %vm301, %v256, 0
      %v315 = vsel %vm301, %v257, 0
      %v318 = vsel %vm301, %v258, 0
      %v321 = vsel %vm301, %v259, 0
      %v324 = vsel %vm301, %v260, 0
      %v327 = vsel %vm301, %v293, 0
      %v330 = vsel %vm301, %v294, 0
      %v333 = vsel %vm301, %v295, 0
      %v336 = vsel %vm301, %v296, 0
      %v339 = vsel %vm301, %v297, 0
      %v342 = vsel %vm301, %v298, 0
      %v345 = vsel %vm301, %v299, 0
      %v348 = vsel %vm301, %v300, 0
      %350 = vmatprep.subr.bf16.mxu0 0
      %351 = vmatpush1.bf16.xpose.msra.mxu0 %v327
      %352 = vmatprep.subr.bf16.mxu0 0
      %353 = vmatpush1.bf16.xpose.msra.mxu0 %v330
      %354 = vmatprep.subr.bf16.mxu0 0
      %355 = vmatpush1.bf16.xpose.msra.mxu0 %v333
      %356 = vmatprep.subr.bf16.mxu0 0
      %357 = vmatpush1.bf16.xpose.msra.mxu0 %v336
      %358 = vmatprep.subr.bf16.mxu0 0
      %359 = vmatpush1.bf16.xpose.msra.mxu0 %v339
      %360 = vmatprep.subr.bf16.mxu0 0
      %361 = vmatpush1.bf16.xpose.msra.mxu0 %v342
      %362 = vmatprep.subr.bf16.mxu0 0
      %363 = vmatpush1.bf16.xpose.msra.mxu0 %v345
      %364 = vmatprep.subr.bf16.mxu0 0
      %365 = vmatpush1.bf16.xpose.msra.mxu0 %v348
      %366 = vmatprep.subr.bf16.mxu0 0
      %367 = vmatpush1.bf16.xpose.msra.mxu0 0
      %368 = vmatprep.subr.bf16.mxu0 0
      %369 = vmatpush1.bf16.xpose.msra.mxu0 0
      %370 = vmatprep.subr.bf16.mxu0 0
      %371 = vmatpush1.bf16.xpose.msra.mxu0 0
      %372 = vmatprep.subr.bf16.mxu0 0
      %373 = vmatpush1.bf16.xpose.msra.mxu0 0
      %374 = vmatprep.subr.bf16.mxu0 0
      %375 = vmatpush1.bf16.xpose.msra.mxu0 0
      %376 = vmatprep.subr.bf16.mxu0 0
      %377 = vmatpush1.bf16.xpose.msra.mxu0 0
      %378 = vmatprep.subr.bf16.mxu0 0
      %379 = vmatpush1.bf16.xpose.msra.mxu0 0
      %380 = vmatprep.subr.bf16.mxu0 0
      %381 = vmatpush1.bf16.xpose.msra.mxu0 0
      %382 = vmatprep.mubr.bf16.mxu0 0
      %383 = vmatmul.mubr.bf16.gmra.mrb[0].mxu0 %v303
      %v384 = vpop.f32.mrb[0].mxu0
      %v385 = vadd.f32 0.0, %v384
      %v386 = vpop.f32.mrb[0].mxu0
      %v387 = vpop.f32.mrb[0].mxu0
      %v388 = vadd.f32 0.0, %v387
      %v389 = vpop.f32.mrb[0].mxu0
      %390 = vmatprep.mubr.bf16.mxu0 0
      %391 = vmatmul.mubr.bf16.gmra.mrb[0].mxu0 %v306
      %v392 = vpop.f32.mrb[0].mxu0
      %v393 = vadd.f32 0.0, %v392
      %v394 = vpop.f32.mrb[0].mxu0
      %v395 = vpop.f32.mrb[0].mxu0
      %v396 = vadd.f32 0.0, %v395
      %v397 = vpop.f32.mrb[0].mxu0
      %398 = vmatprep.mubr.bf16.mxu0 0
      %399 = vmatmul.mubr.bf16.gmra.mrb[0].mxu0 %v309
      %v400 = vpop.f32.mrb[0].mxu0
      %v401 = vadd.f32 0.0, %v400
      %v402 = vpop.f32.mrb[0].mxu0
      %v403 = vpop.f32.mrb[0].mxu0
      %v404 = vadd.f32 0.0, %v403
      %v405 = vpop.f32.mrb[0].mxu0
      %406 = vmatprep.mubr.bf16.mxu0 0
      %407 = vmatmul.mubr.bf16.gmra.mrb[0].mxu0 %v312
      %v408 = vpop.f32.mrb[0].mxu0
      %v409 = vadd.f32 0.0, %v408
      %v410 = vpop.f32.mrb[0].mxu0
      %v411 = vpop.f32.mrb[0].mxu0
      %v412 = vadd.f32 0.0, %v411
      %v413 = vpop.f32.mrb[0].mxu0
      %414 = vmatprep.mubr.bf16.mxu0 0
      %415 = vmatmul.mubr.bf16.gmra.mrb[0].mxu0 %v315
      %v416 = vpop.f32.mrb[0].mxu0
      %v417 = vadd.f32 0.0, %v416
      %v418 = vpop.f32.mrb[0].mxu0
      %v419 = vpop.f32.mrb[0].mxu0
      %v420 = vadd.f32 0.0, %v419
      %v421 = vpop.f32.mrb[0].mxu0
      %422 = vmatprep.mubr.bf16.mxu0 0
      %423 = vmatmul.mubr.bf16.gmra.mrb[0].mxu0 %v318
      %v424 = vpop.f32.mrb[0].mxu0
      %v425 = vadd.f32 0.0, %v424
      %v426 = vpop.f32.mrb[0].mxu0
      %v427 = vpop.f32.mrb[0].mxu0
      %v428 = vadd.f32 0.0, %v427
      %v429 = vpop.f32.mrb[0].mxu0
      %430 = vmatprep.mubr.bf16.mxu0 0
      %431 = vmatmul.mubr.bf16.gmra.mrb[0].mxu0 %v321
      %v432 = vpop.f32.mrb[0].mxu0
      %v433 = vadd.f32 0.0, %v432
      %v434 = vpop.f32.mrb[0].mxu0
      %v435 = vpop.f32.mrb[0].mxu0
      %v436 = vadd.f32 0.0, %v435
      %v437 = vpop.f32.mrb[0].mxu0
      %438 = vmatprep.mubr.bf16.mxu0 0
      %439 = vmatmul.mubr.bf16.gmra.mrb[0].mxu0 %v324
      %v440 = vpop.f32.mrb[0].mxu0
      %v441 = vadd.f32 0.0, %v440
      %v442 = vpop.f32.mrb[0].mxu0
      %v443 = vpop.f32.mrb[0].mxu0
      %v444 = vadd.f32 0.0, %v443
      %v445 = vpop.f32.mrb[0].mxu0
      %446 = vdwg.mxu0
      %448 = vrot.lane.b32.xlu0 %v385, 256
      %v449 = vpop.permute.xlu0 %448
      %s451 = sor.u32 256, 8
      %452 = vrot.lane.b32.xlu0 %v388, %s451
      %v453 = vpop.permute.xlu0 %452
      %s455 = sor.u32 256, 16
      %456 = vrot.lane.b32.xlu0 %v393, %s455
      %v457 = vpop.permute.xlu0 %456
      %s459 = sor.u32 256, 24
      %460 = vrot.lane.b32.xlu0 %v396, %s459
      %v461 = vpop.permute.xlu0 %460
      %s463 = sor.u32 256, 32
      %464 = vrot.lane.b32.xlu0 %v401, %s463
      %v465 = vpop.permute.xlu0 %464
      %s467 = sor.u32 256, 40
      %468 = vrot.lane.b32.xlu0 %v404, %s467
      %v469 = vpop.permute.xlu0 %468
      %s471 = sor.u32 256, 48
      %472 = vrot.lane.b32.xlu0 %v409, %s471
      %v473 = vpop.permute.xlu0 %472
      %s475 = sor.u32 256, 56
      %476 = vrot.lane.b32.xlu0 %v412, %s475
      %v477 = vpop.permute.xlu0 %476
      %v478 = vpack.c.bf16 %v453, %v449
      %v479 = vpack.c.bf16 %v461, %v457
      %v480 = vpack.c.bf16 %v469, %v465
      %v481 = vpack.c.bf16 %v477, %v473
      %486 = vrot.lane.b32.xlu0 %v478, 65
      %v487 = vpop.permute.xlu0 %486
      %488 = vrot.lane.b32.xlu0 %v479, 65
      %v489 = vpop.permute.xlu0 %488
      %490 = vrot.lane.b32.xlu0 %v480, 65
      %v491 = vpop.permute.xlu0 %490
      %492 = vrot.lane.b32.xlu0 %v481, 65
      %v493 = vpop.permute.xlu0 %492
      %498 = vxpose.xlu0.c.b16.start [1/8] %v487, 128
      %499 = vxpose.xlu0.c.b16.cont [2/8] %v489, 128
      %500 = vxpose.xlu0.c.b16.cont [3/8] %v491, 128
      %501 = vxpose.xlu0.c.b16.cont [4/8] %v493, 128
      %502 = vxpose.xlu0.c.b16.cont [5/8] 0, 128
      %503 = vxpose.xlu0.c.b16.cont [6/8] 0, 128
      %504 = vxpose.xlu0.c.b16.cont [7/8] 0, 128
      %505 = vxpose.xlu0.c.b16.end [8/8] 0, 128
      %v506 = vpop.trf.xlu0
      %v507 = vpop.trf.xlu0
      %v508 = vpop.trf.xlu0
      %v509 = vpop.trf.xlu0
      %v510 = vpop.trf.xlu0
      %v511 = vpop.trf.xlu0
      %v512 = vpop.trf.xlu0
      %v513 = vpop.trf.xlu0
      %vm518 = vcmask 523264
      %v520 = vsel %vm518, %v506, 0
      %v523 = vsel %vm518, %v507, 0
      %v526 = vsel %vm518, %v508, 0
      %v529 = vsel %vm518, %v509, 0
      %531 = vmatprep.subr.bf16.mxu0 0
      %532 = vmatpush1.bf16.msra.mxu0 %v253
      %533 = vmatprep.subr.bf16.mxu0 0
      %534 = vmatpush1.bf16.msra.mxu0 %v254
      %535 = vmatprep.subr.bf16.mxu0 0
      %536 = vmatpush1.bf16.msra.mxu0 %v255
      %537 = vmatprep.subr.bf16.mxu0 0
      %538 = vmatpush1.bf16.msra.mxu0 %v256
      %539 = vmatprep.subr.bf16.mxu0 0
      %540 = vmatpush1.bf16.msra.mxu0 0
      %541 = vmatprep.subr.bf16.mxu0 0
      %542 = vmatpush1.bf16.msra.mxu0 0
      %543 = vmatprep.subr.bf16.mxu0 0
      %544 = vmatpush1.bf16.msra.mxu0 0
      %545 = vmatprep.subr.bf16.mxu0 0
      %546 = vmatpush1.bf16.msra.mxu0 0
      %547 = vmatprep.subr.bf16.mxu0 0
      %548 = vmatpush1.bf16.msra.mxu0 0
      %549 = vmatprep.subr.bf16.mxu0 0
      %550 = vmatpush1.bf16.msra.mxu0 0
      %551 = vmatprep.subr.bf16.mxu0 0
      %552 = vmatpush1.bf16.msra.mxu0 0
      %553 = vmatprep.subr.bf16.mxu0 0
      %554 = vmatpush1.bf16.msra.mxu0 0
      %555 = vmatprep.subr.bf16.mxu0 0
      %556 = vmatpush1.bf16.msra.mxu0 0
      %557 = vmatprep.subr.bf16.mxu0 0
      %558 = vmatpush1.bf16.msra.mxu0 0
      %559 = vmatprep.subr.bf16.mxu0 0
      %560 = vmatpush1.bf16.msra.mxu0 0
      %561 = vmatprep.subr.bf16.mxu0 0
      %562 = vmatpush1.bf16.msra.mxu0 0
      %563 = vmatprep.mubr.bf16.mxu0 0
      %564 = vmatmul.mubr.bf16.gmra.mrb[0].mxu0 %v520
      %v565 = vpop.f32.mrb[0].mxu0
      %v566 = vadd.f32 0.0, %v565
      %v567 = vpop.f32.mrb[0].mxu0
      %v568 = vpop.f32.mrb[0].mxu0
      %v569 = vadd.f32 0.0, %v568
      %v570 = vpop.f32.mrb[0].mxu0
      %571 = vmatprep.mubr.bf16.mxu0 0
      %572 = vmatmul.mubr.bf16.gmra.mrb[0].mxu0 %v523
      %v573 = vpop.f32.mrb[0].mxu0
      %v574 = vadd.f32 0.0, %v573
      %v575 = vpop.f32.mrb[0].mxu0
      %v576 = vpop.f32.mrb[0].mxu0
      %v577 = vadd.f32 0.0, %v576
      %v578 = vpop.f32.mrb[0].mxu0
      %579 = vmatprep.mubr.bf16.mxu0 0
      %580 = vmatmul.mubr.bf16.gmra.mrb[0].mxu0 %v526
      %v581 = vpop.f32.mrb[0].mxu0
      %v582 = vadd.f32 0.0, %v581
      %v583 = vpop.f32.mrb[0].mxu0
      %v584 = vpop.f32.mrb[0].mxu0
      %v585 = vadd.f32 0.0, %v584
      %v586 = vpop.f32.mrb[0].mxu0
      %587 = vmatprep.mubr.bf16.mxu0 0
      %588 = vmatmul.mubr.bf16.gmra.mrb[0].mxu0 %v529
      %v589 = vpop.f32.mrb[0].mxu0
      %v590 = vadd.f32 0.0, %v589
      %v591 = vpop.f32.mrb[0].mxu0
      %v592 = vpop.f32.mrb[0].mxu0
      %v593 = vadd.f32 0.0, %v592
      %v594 = vpop.f32.mrb[0].mxu0
      %595 = vdwg.mxu0
      %596 = vst.msk [vmem:[%s180] sm:$0xff] %vm301, %v566
      %597 = vst.msk [vmem:[%s180 + $0x8] sm:$0xff] %vm301, %v569
      %598 = vst.msk [vmem:[%s180 + $0x10] sm:$0xff] %vm301, %v574
      %599 = vst.msk [vmem:[%s180 + $0x18] sm:$0xff] %vm301, %v577
      %600 = vst.msk [vmem:[%s180 + $0x20] sm:$0xff] %vm301, %v582
      %601 = vst.msk [vmem:[%s180 + $0x28] sm:$0xff] %vm301, %v585
      %602 = vst.msk [vmem:[%s180 + $0x30] sm:$0xff] %vm301, %v590
      %603 = vst.msk [vmem:[%s180 + $0x38] sm:$0xff] %vm301, %v593
      %604 = vxpose.xlu0.c.b16.start [1/8] %v253, 128
      %605 = vxpose.xlu0.c.b16.cont [2/8] %v254, 128
      %606 = vxpose.xlu0.c.b16.cont [3/8] %v255, 128
      %607 = vxpose.xlu0.c.b16.cont [4/8] %v256, 128
      %608 = vxpose.xlu0.c.b16.cont [5/8] 0, 128
      %609 = vxpose.xlu0.c.b16.cont [6/8] 0, 128
      %610 = vxpose.xlu0.c.b16.cont [7/8] 0, 128
      %611 = vxpose.xlu0.c.b16.end [8/8] 0, 128
      %v612 = vpop.trf.xlu0
      %v613 = vpop.trf.xlu0
      %v614 = vpop.trf.xlu0
      %v615 = vpop.trf.xlu0
      %v616 = vpop.trf.xlu0
      %v617 = vpop.trf.xlu0
      %v618 = vpop.trf.xlu0
      %v619 = vpop.trf.xlu0
      %v621 = vsel %vm518, %v612, 0
      %623 = vmatprep.subr.bf16.mxu0 0
      %624 = vmatpush1.bf16.msra.mxu0 %v253
      %625 = vmatprep.subr.bf16.mxu0 0
      %626 = vmatpush1.bf16.msra.mxu0 %v254
      %627 = vmatprep.subr.bf16.mxu0 0
      %628 = vmatpush1.bf16.msra.mxu0 %v255
      %629 = vmatprep.subr.bf16.mxu0 0
      %630 = vmatpush1.bf16.msra.mxu0 %v256
      %631 = vmatprep.subr.bf16.mxu0 0
      %632 = vmatpush1.bf16.msra.mxu0 0
      %633 = vmatprep.subr.bf16.mxu0 0
      %634 = vmatpush1.bf16.msra.mxu0 0
      %635 = vmatprep.subr.bf16.mxu0 0
      %636 = vmatpush1.bf16.msra.mxu0 0
      %637 = vmatprep.subr.bf16.mxu0 0
      %638 = vmatpush1.bf16.msra.mxu0 0
      %639 = vmatprep.subr.bf16.mxu0 0
      %640 = vmatpush1.bf16.msra.mxu0 0
      %641 = vmatprep.subr.bf16.mxu0 0
      %642 = vmatpush1.bf16.msra.mxu0 0
      %643 = vmatprep.subr.bf16.mxu0 0
      %644 = vmatpush1.bf16.msra.mxu0 0
      %645 = vmatprep.subr.bf16.mxu0 0
      %646 = vmatpush1.bf16.msra.mxu0 0
      %647 = vmatprep.subr.bf16.mxu0 0
      %648 = vmatpush1.bf16.msra.mxu0 0
      %649 = vmatprep.subr.bf16.mxu0 0
      %650 = vmatpush1.bf16.msra.mxu0 0
      %651 = vmatprep.subr.bf16.mxu0 0
      %652 = vmatpush1.bf16.msra.mxu0 0
      %653 = vmatprep.subr.bf16.mxu0 0
      %654 = vmatpush1.bf16.msra.mxu0 0
      %655 = vmatprep.mubr.bf16.mxu0 0
      %656 = vmatmul.mubr.bf16.gmra.mrb[0].mxu0 %v621
      %v657 = vpop.f32.mrb[0].mxu0
      %v658 = vadd.f32 0.0, %v657
      %v659 = vpop.f32.mrb[0].mxu0
      %v660 = vpop.f32.mrb[0].mxu0
      %v661 = vpop.f32.mrb[0].mxu0
      %662 = vdwg.mxu0
      %vm663 = vcmask 18432
      %664 = vst.msk [vmem:[%s186] sm:$0x7] %vm663, %v658
      %666 = vrot.lane.b32.xlu0 %v417, 256
      %v667 = vpop.permute.xlu0 %666
      %s669 = sor.u32 256, 8
      %670 = vrot.lane.b32.xlu0 %v420, %s669
      %v671 = vpop.permute.xlu0 %670
      %s673 = sor.u32 256, 16
      %674 = vrot.lane.b32.xlu0 %v425, %s673
      %v675 = vpop.permute.xlu0 %674
      %s677 = sor.u32 256, 24
      %678 = vrot.lane.b32.xlu0 %v428, %s677
      %v679 = vpop.permute.xlu0 %678
      %s681 = sor.u32 256, 32
      %682 = vrot.lane.b32.xlu0 %v433, %s681
      %v683 = vpop.permute.xlu0 %682
      %s685 = sor.u32 256, 40
      %686 = vrot.lane.b32.xlu0 %v436, %s685
      %v687 = vpop.permute.xlu0 %686
      %s689 = sor.u32 256, 48
      %690 = vrot.lane.b32.xlu0 %v441, %s689
      %v691 = vpop.permute.xlu0 %690
      %s693 = sor.u32 256, 56
      %694 = vrot.lane.b32.xlu0 %v444, %s693
      %v695 = vpop.permute.xlu0 %694
      %v696 = vpack.c.bf16 %v671, %v667
      %v697 = vpack.c.bf16 %v679, %v675
      %v698 = vpack.c.bf16 %v687, %v683
      %v699 = vpack.c.bf16 %v695, %v691
      %704 = vrot.lane.b32.xlu0 %v696, 65
      %v705 = vpop.permute.xlu0 %704
      %706 = vrot.lane.b32.xlu0 %v697, 65
      %v707 = vpop.permute.xlu0 %706
      %708 = vrot.lane.b32.xlu0 %v698, 65
      %v709 = vpop.permute.xlu0 %708
      %710 = vrot.lane.b32.xlu0 %v699, 65
      %v711 = vpop.permute.xlu0 %710
      %716 = vxpose.xlu0.c.b16.start [1/8] %v705, 128
      %717 = vxpose.xlu0.c.b16.cont [2/8] %v707, 128
      %718 = vxpose.xlu0.c.b16.cont [3/8] %v709, 128
      %719 = vxpose.xlu0.c.b16.cont [4/8] %v711, 128
      %720 = vxpose.xlu0.c.b16.cont [5/8] 0, 128
      %721 = vxpose.xlu0.c.b16.cont [6/8] 0, 128
      %722 = vxpose.xlu0.c.b16.cont [7/8] 0, 128
      %723 = vxpose.xlu0.c.b16.end [8/8] 0, 128
      %v724 = vpop.trf.xlu0
      %v725 = vpop.trf.xlu0
      %v726 = vpop.trf.xlu0
      %v727 = vpop.trf.xlu0
      %v728 = vpop.trf.xlu0
      %v729 = vpop.trf.xlu0
      %v730 = vpop.trf.xlu0
      %v731 = vpop.trf.xlu0
      %v737 = vsel %vm518, %v724, 0
      %v740 = vsel %vm518, %v725, 0
      %v743 = vsel %vm518, %v726, 0
      %v746 = vsel %vm518, %v727, 0
      %748 = vmatprep.subr.bf16.mxu0 0
      %749 = vmatpush1.bf16.msra.mxu0 %v257
      %750 = vmatprep.subr.bf16.mxu0 0
      %751 = vmatpush1.bf16.msra.mxu0 %v258
      %752 = vmatprep.subr.bf16.mxu0 0
      %753 = vmatpush1.bf16.msra.mxu0 %v259
      %754 = vmatprep.subr.bf16.mxu0 0
      %755 = vmatpush1.bf16.msra.mxu0 %v260
      %756 = vmatprep.subr.bf16.mxu0 0
      %757 = vmatpush1.bf16.msra.mxu0 0
      %758 = vmatprep.subr.bf16.mxu0 0
      %759 = vmatpush1.bf16.msra.mxu0 0
      %760 = vmatprep.subr.bf16.mxu0 0
      %761 = vmatpush1.bf16.msra.mxu0 0
      %762 = vmatprep.subr.bf16.mxu0 0
      %763 = vmatpush1.bf16.msra.mxu0 0
      %764 = vmatprep.subr.bf16.mxu0 0
      %765 = vmatpush1.bf16.msra.mxu0 0
      %766 = vmatprep.subr.bf16.mxu0 0
      %767 = vmatpush1.bf16.msra.mxu0 0
      %768 = vmatprep.subr.bf16.mxu0 0
      %769 = vmatpush1.bf16.msra.mxu0 0
      %770 = vmatprep.subr.bf16.mxu0 0
      %771 = vmatpush1.bf16.msra.mxu0 0
      %772 = vmatprep.subr.bf16.mxu0 0
      %773 = vmatpush1.bf16.msra.mxu0 0
      %774 = vmatprep.subr.bf16.mxu0 0
      %775 = vmatpush1.bf16.msra.mxu0 0
      %776 = vmatprep.subr.bf16.mxu0 0
      %777 = vmatpush1.bf16.msra.mxu0 0
      %778 = vmatprep.subr.bf16.mxu0 0
      %779 = vmatpush1.bf16.msra.mxu0 0
      %780 = vmatprep.mubr.bf16.mxu0 0
      %781 = vmatmul.mubr.bf16.gmra.mrb[0].mxu0 %v737
      %v782 = vpop.f32.mrb[0].mxu0
      %v783 = vadd.f32 0.0, %v782
      %v784 = vpop.f32.mrb[0].mxu0
      %v785 = vpop.f32.mrb[0].mxu0
      %v786 = vadd.f32 0.0, %v785
      %v787 = vpop.f32.mrb[0].mxu0
      %788 = vmatprep.mubr.bf16.mxu0 0
      %789 = vmatmul.mubr.bf16.gmra.mrb[0].mxu0 %v740
      %v790 = vpop.f32.mrb[0].mxu0
      %v791 = vadd.f32 0.0, %v790
      %v792 = vpop.f32.mrb[0].mxu0
      %v793 = vpop.f32.mrb[0].mxu0
      %v794 = vadd.f32 0.0, %v793
      %v795 = vpop.f32.mrb[0].mxu0
      %796 = vmatprep.mubr.bf16.mxu0 0
      %797 = vmatmul.mubr.bf16.gmra.mrb[0].mxu0 %v743
      %v798 = vpop.f32.mrb[0].mxu0
      %v799 = vadd.f32 0.0, %v798
      %v800 = vpop.f32.mrb[0].mxu0
      %v801 = vpop.f32.mrb[0].mxu0
      %v802 = vadd.f32 0.0, %v801
      %v803 = vpop.f32.mrb[0].mxu0
      %804 = vmatprep.mubr.bf16.mxu0 0
      %805 = vmatmul.mubr.bf16.gmra.mrb[0].mxu0 %v746
      %v806 = vpop.f32.mrb[0].mxu0
      %v807 = vadd.f32 0.0, %v806
      %v808 = vpop.f32.mrb[0].mxu0
      %v809 = vpop.f32.mrb[0].mxu0
      %v810 = vadd.f32 0.0, %v809
      %v811 = vpop.f32.mrb[0].mxu0
      %812 = vdwg.mxu0
      %813 = vst.msk [vmem:[%s180 + $0x40] sm:$0xff] %vm301, %v783
      %814 = vst.msk [vmem:[%s180 + $0x48] sm:$0xff] %vm301, %v786
      %815 = vst.msk [vmem:[%s180 + $0x50] sm:$0xff] %vm301, %v791
      %816 = vst.msk [vmem:[%s180 + $0x58] sm:$0xff] %vm301, %v794
      %817 = vst.msk [vmem:[%s180 + $0x60] sm:$0xff] %vm301, %v799
      %818 = vst.msk [vmem:[%s180 + $0x68] sm:$0xff] %vm301, %v802
      %819 = vst.msk [vmem:[%s180 + $0x70] sm:$0xff] %vm301, %v807
      %820 = vst.msk [vmem:[%s180 + $0x78] sm:$0xff] %vm301, %v810
      %821 = vxpose.xlu0.c.b16.start [1/8] %v257, 128
      %822 = vxpose.xlu0.c.b16.cont [2/8] %v258, 128
      %823 = vxpose.xlu0.c.b16.cont [3/8] %v259, 128
      %824 = vxpose.xlu0.c.b16.cont [4/8] %v260, 128
      %825 = vxpose.xlu0.c.b16.cont [5/8] 0, 128
      %826 = vxpose.xlu0.c.b16.cont [6/8] 0, 128
      %827 = vxpose.xlu0.c.b16.cont [7/8] 0, 128
      %828 = vxpose.xlu0.c.b16.end [8/8] 0, 128
      %v829 = vpop.trf.xlu0
      %v830 = vpop.trf.xlu0
      %v831 = vpop.trf.xlu0
      %v832 = vpop.trf.xlu0
      %v833 = vpop.trf.xlu0
      %v834 = vpop.trf.xlu0
      %v835 = vpop.trf.xlu0
      %v836 = vpop.trf.xlu0
      %v838 = vsel %vm518, %v829, 0
      %840 = vmatprep.subr.bf16.mxu0 0
      %841 = vmatpush1.bf16.msra.mxu0 %v257
      %842 = vmatprep.subr.bf16.mxu0 0
      %843 = vmatpush1.bf16.msra.mxu0 %v258
      %844 = vmatprep.subr.bf16.mxu0 0
      %845 = vmatpush1.bf16.msra.mxu0 %v259
      %846 = vmatprep.subr.bf16.mxu0 0
      %847 = vmatpush1.bf16.msra.mxu0 %v260
      %848 = vmatprep.subr.bf16.mxu0 0
      %849 = vmatpush1.bf16.msra.mxu0 0
      %850 = vmatprep.subr.bf16.mxu0 0
      %851 = vmatpush1.bf16.msra.mxu0 0
      %852 = vmatprep.subr.bf16.mxu0 0
      %853 = vmatpush1.bf16.msra.mxu0 0
      %854 = vmatprep.subr.bf16.mxu0 0
      %855 = vmatpush1.bf16.msra.mxu0 0
      %856 = vmatprep.subr.bf16.mxu0 0
      %857 = vmatpush1.bf16.msra.mxu0 0
      %858 = vmatprep.subr.bf16.mxu0 0
      %859 = vmatpush1.bf16.msra.mxu0 0
      %860 = vmatprep.subr.bf16.mxu0 0
      %861 = vmatpush1.bf16.msra.mxu0 0
      %862 = vmatprep.subr.bf16.mxu0 0
      %863 = vmatpush1.bf16.msra.mxu0 0
      %864 = vmatprep.subr.bf16.mxu0 0
      %865 = vmatpush1.bf16.msra.mxu0 0
      %866 = vmatprep.subr.bf16.mxu0 0
      %867 = vmatpush1.bf16.msra.mxu0 0
      %868 = vmatprep.subr.bf16.mxu0 0
      %869 = vmatpush1.bf16.msra.mxu0 0
      %870 = vmatprep.subr.bf16.mxu0 0
      %871 = vmatpush1.bf16.msra.mxu0 0
      %872 = vmatprep.mubr.bf16.mxu0 0
      %873 = vmatmul.mubr.bf16.gmra.mrb[0].mxu0 %v838
      %v874 = vpop.f32.mrb[0].mxu0
      %v875 = vadd.f32 0.0, %v874
      %v876 = vpop.f32.mrb[0].mxu0
      %v877 = vpop.f32.mrb[0].mxu0
      %v878 = vpop.f32.mrb[0].mxu0
      %879 = vdwg.mxu0
      %s880 = scalar_lea.vmem %s186, 4
      %881 = vst.msk [vmem:[%s880] sm:$0x7] %vm663, %v875
      %s882 = smul.u32 16, %s15
      %p883 = scmp.lt.s32.totalorder %s882, 31
      %s884 = scalar_select %p883, %s882, 31
      %s885 = smul.addr %s884, 8
      %s886 = scalar_lea.vmem %s2, %s885
      %s887 = smul.u32 2, %s15
      %p888 = scmp.lt.s32.totalorder %s887, 3
      %s889 = scalar_select %p888, %s887, 3
      %s890 = smul.addr %s889, 4
      %s891 = scalar_lea.vmem %s3, %s890
      // Predicated region
      $region29: #{tpu_custom_call.1} parent=27 // pred_check
        %p892 = pneg %p80
      $region30: #{tpu_custom_call.1} parent=27 // pred_check_branch
        %894 = sbr.rel (%p892) target = $region32
      $region31: #{tpu_custom_call.1} parent=27 // pred_region
        %s895 = smul.u32 16, %s15
      $region32: #{tpu_custom_call.1} parent=27 // pred_fallthru
        _
      // Predicated region
      $region33: #{tpu_custom_call.1} parent=27 // pred_check
        %p896 = pneg %p106
      $region34: #{tpu_custom_call.1} parent=27 // pred_check_branch
        %898 = sbr.rel (%p896) target = $region36
      $region35: #{tpu_custom_call.1} parent=27 // pred_region
        %s899 = smul.u32 2, %s15
      $region36: #{tpu_custom_call.1} parent=27 // pred_fallthru
        _
    $region28: #{tpu_custom_call.1} parent=5 // pred_fallthru
      _
    %p900 = scmp.le.s32.totalorder 2, %s10
    // Predicated region
    $region37: #{tpu_custom_call.1} parent=5 // pred_check
      %p901 = pneg %p900
    $region38: #{tpu_custom_call.1} parent=5 // pred_check_branch
      %903 = sbr.rel (%p901) target = $region40
    $region39: #{tpu_custom_call.1} parent=5 // pred_region
      %s904 = ssub.s32 %s10, 2
      // Predicated region
      $region41: #{tpu_custom_call.1} parent=39 // pred_check
        %p905 = pneg %p86
      $region42: #{tpu_custom_call.1} parent=39 // pred_check_branch
        %907 = sbr.rel (%p905) target = $region44
      $region43: #{tpu_custom_call.1} parent=39 // pred_region
        %s908 = smul.u32 16, %s16
        %p909 = scmp.lt.s32.totalorder %s908, 31
        %s910 = scalar_select %p909, %s908, 31
        %s911 = smul.addr %s910, 8
        %s912 = scalar_lea.vmem %s2, %s911
      $region44: #{tpu_custom_call.1} parent=39 // pred_fallthru
        _
      // Predicated region
      $region45: #{tpu_custom_call.1} parent=39 // pred_check
        %p913 = pneg %p112
      $region46: #{tpu_custom_call.1} parent=39 // pred_check_branch
        %915 = sbr.rel (%p913) target = $region48
      $region47: #{tpu_custom_call.1} parent=39 // pred_region
        %s916 = smul.u32 2, %s16
        %p917 = scmp.lt.s32.totalorder %s916, 3
        %s918 = scalar_select %p917, %s916, 3
        %s919 = smul.addr %s918, 4
        %s920 = scalar_lea.vmem %s3, %s919
      $region48: #{tpu_custom_call.1} parent=39 // pred_fallthru
        _
    $region40: #{tpu_custom_call.1} parent=5 // pred_fallthru
      _
  $region6: #{tpu_custom_call.1} parent=0 // loop_footer
    %s14 = sadd.s32 1, %s10
  $region7: #{tpu_custom_call.1} parent=0 // loop_footer_branch
    %9 = sbr.rel target = $region3
  $region8: #{tpu_custom_call.1} parent=0 // loop_exit
    _

</llo_original>
